<compile_context>
chip_gen: v5e
topology: v5e:2x2
jax: 0.10.0
libtpu: 0.0.40
codegen_flags: <defaults>
</compile_context>

<pallas_src>
import jax
import jax.numpy as jnp
from jax.experimental import pallas as pl
from jax.experimental.pallas import tpu as pltpu

K_RAW = 28 * 28      # 784 contraction dim (NOT padded in HBM)
HIDDEN = 256
N_PAD = 128          # lane-dense output slab; real latents live in [:latent_dim]


def _mlp_encoder_kernel(x_ref, w1_ref, b1_ref, w2_ref, b2_ref, z_ref):
    # x:(TB,784) f32   w1:(784,256) bf16   b1:(1,256) f32
    # w2:(256,128) bf16   b2:(1,128) f32   z:(TB,128) bf16
    x = x_ref[...].astype(jnp.bfloat16)            # VPU cast, hidden under the DMA
    h = jnp.dot(x, w1_ref[...], preferred_element_type=jnp.float32)
    h = jnp.maximum(h + b1_ref[...], 0.0)          # bias + ReLU in f32
    z = jnp.dot(h.astype(jnp.bfloat16), w2_ref[...],
                preferred_element_type=jnp.float32)
    z_ref[...] = (z + b2_ref[...]).astype(z_ref.dtype)


def _pick_tiling(batch):
    """Per-generation batch-tile size and VMEM limit; tight tiles (no 2x padding waste)."""
    try:
        vmem_cap = pltpu.get_tpu_info().vmem_capacity_bytes
    except Exception:
        vmem_cap = 64 * 1024 * 1024                      # conservative (v7x-sized)
    if vmem_cap >= 96 * 1024 * 1024:                     # v5e / v6e: 128 MiB VMEM
        cap, vmem_limit = 2048, 64 * 1024 * 1024
    else:                                                # v7x: 64 MiB per TC
        cap, vmem_limit = 1024, 40 * 1024 * 1024
    n_tiles = max(1, pl.cdiv(batch, cap))
    tb = -(-batch // n_tiles)                            # ceil(batch / n_tiles)
    tb = ((tb + 7) // 8) * 8                             # sublane multiple
    return tb, n_tiles * tb, vmem_limit


def mlp_encoder(x_nchw, w1, b1, w2, b2):
    """x_nchw: (B, 1, 28, 28) float32 -> z: (B, latent_dim) float32."""
    B = x_nchw.shape[0]
    latent_dim = w2.shape[1]

    # nn.Flatten() on NCHW (row-major, matches PyTorch). Pure reshape, no HBM pass.
    x_flat = x_nchw.reshape(B, K_RAW).astype(jnp.float32)

    # One-time weight prep (tiny): bf16 MXU operands, f32 biases; latent columns
    # padded to a 128-lane slab so output stores are unmasked vst.
    w1_b = w1.astype(jnp.bfloat16)                                   # (784, 256)
    b1_r = b1.reshape(1, HIDDEN).astype(jnp.float32)                 # (1, 256)
    w2_p = jnp.pad(w2.astype(jnp.float32),
                   ((0, 0), (0, N_PAD - latent_dim))).astype(jnp.bfloat16)
    b2_p = jnp.pad(b2.astype(jnp.float32),
                   ((0, N_PAD - latent_dim),)).reshape(1, N_PAD)

    tb, b_pad, vmem_limit = _pick_tiling(B)
    if b_pad != B:
        x_flat = jnp.pad(x_flat, ((0, b_pad - B), (0, 0)))

    z_pad = pl.pallas_call(
        _mlp_encoder_kernel,
        out_shape=jax.ShapeDtypeStruct((b_pad, N_PAD), jnp.bfloat16),
        grid_spec=pltpu.PrefetchScalarGridSpec(
            num_scalar_prefetch=0,
            grid=(b_pad // tb,),
            in_specs=[
                pl.BlockSpec((tb, K_RAW), lambda i: (i, 0)),       # x tile (streamed)
                pl.BlockSpec((K_RAW, HIDDEN), lambda i: (0, 0)),   # w1 (resident)
                pl.BlockSpec((1, HIDDEN), lambda i: (0, 0)),       # b1 (resident)
                pl.BlockSpec((HIDDEN, N_PAD), lambda i: (0, 0)),   # w2 (resident)
                pl.BlockSpec((1, N_PAD), lambda i: (0, 0)),        # b2 (resident)
            ],
            out_specs=pl.BlockSpec((tb, N_PAD), lambda i: (i, 0)),
        ),
        compiler_params=pltpu.CompilerParams(
            dimension_semantics=("parallel",),     # megacore-shardable batch axis
            vmem_limit_bytes=vmem_limit,
        ),
    )(x_flat, w1_b, b1_r, w2_p, b2_p)

    # Latents are bf16-rounded (as is the whole MXU path); upcast on the tiny slice.
    return z_pad[:B, :latent_dim].astype(jnp.float32)


def init_params(key, latent_dim=2):
    """Deterministic init mirroring nn.Linear default (uniform +-1/sqrt(fan_in))."""
    k1, k2, k3, k4 = jax.random.split(key, 4)
    bound1 = 1.0 / jnp.sqrt(K_RAW)
    bound2 = 1.0 / jnp.sqrt(HIDDEN)
    w1 = jax.random.uniform(k1, (K_RAW, HIDDEN), jnp.float32, -bound1, bound1)
    b1 = jax.random.uniform(k2, (HIDDEN,), jnp.float32, -bound1, bound1)
    w2 = jax.random.uniform(k3, (HIDDEN, latent_dim), jnp.float32, -bound2, bound2)
    b2 = jax.random.uniform(k4, (latent_dim,), jnp.float32, -bound2, bound2)
    return w1, b1, w2, b2


if __name__ == "__main__":
    key = jax.random.PRNGKey(0)
    kx, kp = jax.random.split(key)

    B, latent_dim = 8, 2
    x = jax.random.normal(kx, (B, 1, 28, 28), jnp.float32)   # NCHW like PyTorch
    w1, b1, w2, b2 = init_params(kp, latent_dim)

    z = mlp_encoder(x, w1, b1, w2, b2)
    jax.block_until_ready(z)

    # Reference check in plain f32 JAX (kernel uses bf16 MXU path -> looser tol).
    x_flat = x.reshape(B, -1)
    z_ref = jnp.maximum(x_flat @ w1 + b1, 0.0) @ w2 + b2
    assert z.shape == (B, latent_dim)
    assert jnp.allclose(z, z_ref, atol=5e-2, rtol=5e-2), (
        f"max abs err {jnp.max(jnp.abs(z - z_ref))}")

    print("KERNEL_OK")
</pallas_src>

<mosaic_0001>
module attributes {stable_mosaic.version = 11 : i64} {
  func.func @_mlp_encoder_kernel(%arg0: i32, %arg1: memref<8x784xf32, #tpu.memory_space<vmem>>, %arg2: memref<784x256xbf16, #tpu.memory_space<vmem>>, %arg3: memref<1x256xf32, #tpu.memory_space<vmem>>, %arg4: memref<256x128xbf16, #tpu.memory_space<vmem>>, %arg5: memref<1x128xf32, #tpu.memory_space<vmem>>, %arg6: memref<8x128xbf16, #tpu.memory_space<vmem>>) attributes {dimension_semantics = [#tpu.dimension_semantics<parallel>], iteration_bounds = array<i64: 1>, scalar_prefetch = 0 : i64, scratch_operands = 0 : i64, tpu.core_type = #tpu.core_type<tc>, window_params = [{transform_indices = @transform_0, window_bounds = array<i64: 8, 784>}, {pipeline_mode = #tpu.pipeline_mode<synchronous>, transform_indices = @transform_1, window_bounds = array<i64: 784, 256>}, {pipeline_mode = #tpu.pipeline_mode<synchronous>, transform_indices = @transform_2, window_bounds = array<i64: 1, 256>}, {pipeline_mode = #tpu.pipeline_mode<synchronous>, transform_indices = @transform_3, window_bounds = array<i64: 256, 128>}, {pipeline_mode = #tpu.pipeline_mode<synchronous>, transform_indices = @transform_4, window_bounds = array<i64: 1, 128>}, {transform_indices = @transform_5, window_bounds = array<i64: 8, 128>}]} {
    %c0 = arith.constant 0 : index
    %c0_0 = arith.constant 0 : index
    %0 = vector.load %arg1[%c0, %c0_0] : memref<8x784xf32, #tpu.memory_space<vmem>>, vector<8x784xf32>
    %1 = arith.truncf %0 : vector<8x784xf32> to vector<8x784xbf16>
    %c0_1 = arith.constant 0 : index
    %c0_2 = arith.constant 0 : index
    %2 = vector.load %arg2[%c0_1, %c0_2] : memref<784x256xbf16, #tpu.memory_space<vmem>>, vector<784x256xbf16>
    %cst = arith.constant dense<0.000000e+00> : vector<8x256xf32>
    %3 = tpu.matmul %1, %2, %cst {dimension_numbers = #tpu.dot_dimension_numbers<[1], [0], [0], [1], [0, 0, 1, 1], [], []>} : vector<8x784xbf16>, vector<784x256xbf16>, vector<8x256xf32> -> vector<8x256xf32>
    %c0_3 = arith.constant 0 : index
    %c0_4 = arith.constant 0 : index
    %4 = vector.load %arg3[%c0_3, %c0_4] : memref<1x256xf32, #tpu.memory_space<vmem>>, vector<1x256xf32>
    %5 = vector.broadcast %4 : vector<1x256xf32> to vector<8x256xf32>
    %6 = arith.addf %3, %5 : vector<8x256xf32>
    %cst_5 = arith.constant 0.000000e+00 : f32
    %7 = vector.broadcast %cst_5 : f32 to vector<8x256xf32>
    %8 = arith.maximumf %6, %7 : vector<8x256xf32>
    %9 = arith.truncf %8 : vector<8x256xf32> to vector<8x256xbf16>
    %c0_6 = arith.constant 0 : index
    %c0_7 = arith.constant 0 : index
    %10 = vector.load %arg4[%c0_6, %c0_7] : memref<256x128xbf16, #tpu.memory_space<vmem>>, vector<256x128xbf16>
    %cst_8 = arith.constant dense<0.000000e+00> : vector<8x128xf32>
    %11 = tpu.matmul %9, %10, %cst_8 {dimension_numbers = #tpu.dot_dimension_numbers<[1], [0], [0], [1], [0, 0, 1, 1], [], []>} : vector<8x256xbf16>, vector<256x128xbf16>, vector<8x128xf32> -> vector<8x128xf32>
    %c0_9 = arith.constant 0 : index
    %c0_10 = arith.constant 0 : index
    %12 = vector.load %arg5[%c0_9, %c0_10] : memref<1x128xf32, #tpu.memory_space<vmem>>, vector<1x128xf32>
    %13 = vector.broadcast %12 : vector<1x128xf32> to vector<8x128xf32>
    %14 = arith.addf %11, %13 : vector<8x128xf32>
    %15 = arith.truncf %14 : vector<8x128xf32> to vector<8x128xbf16>
    %c0_11 = arith.constant 0 : index
    %c0_12 = arith.constant 0 : index
    %16 = vector.load %arg6[%c0_11, %c0_12] : memref<8x128xbf16, #tpu.memory_space<vmem>>, vector<8x128xbf16>
    tpu.vector_store %arg6[%c0_11, %c0_12], %15 {strides = array<i32>} : memref<8x128xbf16, #tpu.memory_space<vmem>>, vector<8x128xbf16>,
    return
  }
  func.func @transform_0(%arg0: i32) -> (i32, i32) {
    %c0_i32 = arith.constant 0 : i32
    %c0_i32_0 = arith.constant 0 : i32
    return %arg0, %c0_i32 : i32, i32
  }
  func.func @transform_1(%arg0: i32) -> (i32, i32) {
    %c0_i32 = arith.constant 0 : i32
    %c0_i32_0 = arith.constant 0 : i32
    %c0_i32_1 = arith.constant 0 : i32
    return %c0_i32, %c0_i32_0 : i32, i32
  }
  func.func @transform_2(%arg0: i32) -> (i32, i32) {
    %c0_i32 = arith.constant 0 : i32
    %c0_i32_0 = arith.constant 0 : i32
    %c0_i32_1 = arith.constant 0 : i32
    return %c0_i32, %c0_i32_0 : i32, i32
  }
  func.func @transform_3(%arg0: i32) -> (i32, i32) {
    %c0_i32 = arith.constant 0 : i32
    %c0_i32_0 = arith.constant 0 : i32
    %c0_i32_1 = arith.constant 0 : i32
    return %c0_i32, %c0_i32_0 : i32, i32
  }
  func.func @transform_4(%arg0: i32) -> (i32, i32) {
    %c0_i32 = arith.constant 0 : i32
    %c0_i32_0 = arith.constant 0 : i32
    %c0_i32_1 = arith.constant 0 : i32
    return %c0_i32, %c0_i32_0 : i32, i32
  }
  func.func @transform_5(%arg0: i32) -> (i32, i32) {
    %c0_i32 = arith.constant 0 : i32
    %c0_i32_0 = arith.constant 0 : i32
    return %arg0, %c0_i32 : i32, i32
  }
}

</mosaic_0001>

<llo_original>
// kernel: tpu_custom_call.1
$region0: #{tpu_custom_call.1}
  #allocation0 [shape = 'u32[]', space=smem, size = 0x4, offset = 0x4, fixed_abs, tag = 'smem constant byte address 0x4 - core index']
  #allocation1 [shape = 'u32[72,128]{1,0:T(1,128)}', space=vmem, size = 0x9000, scoped, tag = 'internal scratch']
  %s0 = inlined_call_operand.hbm [shape: f32[8,784], index: 0, kind: input, shape index: {}]
  %s1 = inlined_call_operand.hbm [shape: bf16[784,256], index: 1, kind: input, shape index: {}]
  %s2 = inlined_call_operand.hbm [shape: f32[1,256], index: 2, kind: input, shape index: {}]
  %s3 = inlined_call_operand.hbm [shape: bf16[256,128], index: 3, kind: input, shape index: {}]
  %s4 = inlined_call_operand.vmem [shape: f32[1,128], index: 4, kind: input, shape index: {}]
  %s5 = inlined_call_operand.hbm [shape: bf16[8,128], index: 5, kind: output, shape index: {}]
  %s6 = sld [smem:[#allocation0]]
  $region46: #{tpu_custom_call.1} parent=0
    _
  %s8 = ssub.s32 1, %s6
  %s9 = scalar_select 0, %s8, %s6
  $region1: #{tpu_custom_call.1} parent=0
    #allocation2 [shape = 'u8[28672]{0}', space=vmem, size = 0x7000, scoped, tag = 'input window, operand 0, single buffered']
    #allocation3 [shape = 's32[1]{0}', space=sflag, size = 0x4, scoped, tag = 'scoped memory for tpu_custom_call.1']
    #allocation4 [shape = 's32[1]{0}', space=sflag, size = 0x4, scoped, tag = 'scoped memory for tpu_custom_call.1']
    #allocation5 [shape = 'u8[401408]{0}', space=vmem, size = 0x62000, scoped, tag = 'input window, operand 1, single buffered']
    #allocation6 [shape = 's32[1]{0}', space=sflag, size = 0x4, scoped, tag = 'scoped memory for tpu_custom_call.1']
    #allocation7 [shape = 'u8[1024]{0}', space=vmem, size = 0x400, scoped, tag = 'input window, operand 2, single buffered']
    #allocation8 [shape = 'u8[65536]{0}', space=vmem, size = 0x10000, scoped, tag = 'input window, operand 3, single buffered']
    #allocation9 [shape = 's32[1]{0}', space=sflag, size = 0x4, scoped, tag = 'scoped memory for tpu_custom_call.1']
    #allocation10 [shape = 'u8[2048]{0}', space=vmem, size = 0x800, scoped, tag = 'output window, operand 0, single buffered']
    %10 = vsyncpa [#allocation3], 0
    %11 = vsyncpa [#allocation6], 0
    %12 = vsyncpa [#allocation9], 0
    %13 = vsyncpa [#allocation4], 0
    // Predicated region
    $region2: #{tpu_custom_call.1} parent=1 // pred_check
      _
    $region3: #{tpu_custom_call.1} parent=1 // pred_check_branch
      %15 = sbr.rel (0) target = $region5
    $region4: #{tpu_custom_call.1} parent=1 // pred_region
      %17 = vsyncadd [#allocation3], 0
      %s19 = sshll.u32 %s0, 4
      %s20 = int_to_ptr.hbm [resolvable:$true] %s19
      %s21 = sshll.u32 [#allocation2], 4
      %s22 = int_to_ptr.vmem [resolvable:$true] %s21
      %24 = dma.hbm_to_vmem [thread:$0]  %s20, 896, %s22, [#allocation3]
    $region5: #{tpu_custom_call.1} parent=1 // pred_fallthru
      _
    // Predicated region
    $region6: #{tpu_custom_call.1} parent=1 // pred_check
      _
    $region7: #{tpu_custom_call.1} parent=1 // pred_check_branch
      %26 = sbr.rel (0) target = $region9
    $region8: #{tpu_custom_call.1} parent=1 // pred_region
      %28 = vsyncadd [#allocation6], 0
      %s29 = sshll.u32 %s1, 4
      %s30 = int_to_ptr.hbm [resolvable:$true] %s29
      %s31 = sshll.u32 [#allocation5], 4
      %s32 = int_to_ptr.vmem [resolvable:$true] %s31
      %37 = dma.hbm_to_vmem [thread:$0]  %s30, 12544, %s32, [#allocation6], 128, 128, 8
    $region9: #{tpu_custom_call.1} parent=1 // pred_fallthru
      _
    // Predicated region
    $region10: #{tpu_custom_call.1} parent=1 // pred_check
      _
    $region11: #{tpu_custom_call.1} parent=1 // pred_check_branch
      %39 = sbr.rel (0) target = $region13
    $region12: #{tpu_custom_call.1} parent=1 // pred_region
      %41 = vsyncadd [#allocation6], 0
      %s43 = sshll.u32 %s2, 4
      %s44 = int_to_ptr.hbm [resolvable:$true] %s43
      %s45 = sshll.u32 [#allocation7], 4
      %s46 = int_to_ptr.vmem [resolvable:$true] %s45
      %48 = dma.hbm_to_vmem [thread:$0]  %s44, 32, %s46, [#allocation6]
    $region13: #{tpu_custom_call.1} parent=1 // pred_fallthru
      _
    // Predicated region
    $region14: #{tpu_custom_call.1} parent=1 // pred_check
      _
    $region15: #{tpu_custom_call.1} parent=1 // pred_check_branch
      %50 = sbr.rel (0) target = $region17
    $region16: #{tpu_custom_call.1} parent=1 // pred_region
      %52 = vsyncadd [#allocation9], 0
      %s53 = sshll.u32 %s3, 4
      %s54 = int_to_ptr.hbm [resolvable:$true] %s53
      %s55 = sshll.u32 [#allocation8], 4
      %s56 = int_to_ptr.vmem [resolvable:$true] %s55
      %61 = dma.hbm_to_vmem [thread:$0]  %s54, 2048, %s56, [#allocation9], 64, 64, 4
    $region17: #{tpu_custom_call.1} parent=1 // pred_fallthru
      _
    // Predicated region
    $region18: #{tpu_custom_call.1} parent=1 // pred_check
      _
    $region19: #{tpu_custom_call.1} parent=1 // pred_check_branch
      %63 = sbr.rel (0) target = $region21
    $region20: #{tpu_custom_call.1} parent=1 // pred_region
      _
    $region21: #{tpu_custom_call.1} parent=1 // pred_fallthru
      _
    // Predicated region
    $region22: #{tpu_custom_call.1} parent=1 // pred_check
      _
    $region23: #{tpu_custom_call.1} parent=1 // pred_check_branch
      %65 = sbr.rel (0) target = $region25
    $region24: #{tpu_custom_call.1} parent=1 // pred_region
      %67 = dma.done [#allocation3], 896
    $region25: #{tpu_custom_call.1} parent=1 // pred_fallthru
      _
    // Predicated region
    $region26: #{tpu_custom_call.1} parent=1 // pred_check
      _
    $region27: #{tpu_custom_call.1} parent=1 // pred_check_branch
      %69 = sbr.rel (0) target = $region29
    $region28: #{tpu_custom_call.1} parent=1 // pred_region
      %71 = dma.done [#allocation6], 12544
    $region29: #{tpu_custom_call.1} parent=1 // pred_fallthru
      _
    // Predicated region
    $region30: #{tpu_custom_call.1} parent=1 // pred_check
      _
    $region31: #{tpu_custom_call.1} parent=1 // pred_check_branch
      %73 = sbr.rel (0) target = $region33
    $region32: #{tpu_custom_call.1} parent=1 // pred_region
      %75 = dma.done [#allocation6], 32
    $region33: #{tpu_custom_call.1} parent=1 // pred_fallthru
      _
    // Predicated region
    $region34: #{tpu_custom_call.1} parent=1 // pred_check
      _
    $region35: #{tpu_custom_call.1} parent=1 // pred_check_branch
      %77 = sbr.rel (0) target = $region37
    $region36: #{tpu_custom_call.1} parent=1 // pred_region
      %79 = dma.done [#allocation9], 2048
    $region37: #{tpu_custom_call.1} parent=1 // pred_fallthru
      _
    %v81 = vld [vmem:[#allocation2] sm:$0xff]
    %v82 = vld [vmem:[#allocation2 + $0x8] sm:$0xff]
    %v83 = vld [vmem:[#allocation2 + $0x10] sm:$0xff]
    %v84 = vld [vmem:[#allocation2 + $0x18] sm:$0xff]
    %v85 = vld [vmem:[#allocation2 + $0x20] sm:$0xff]
    %v86 = vld [vmem:[#allocation2 + $0x28] sm:$0xff]
    %v87 = vld [vmem:[#allocation2 + $0x30] sm:$0xff]
    %v88 = vpack.c.bf16 %v81, %v81
    %v89 = vpack.c.bf16 %v82, %v82
    %v90 = vpack.c.bf16 %v83, %v83
    %v91 = vpack.c.bf16 %v84, %v84
    %v92 = vpack.c.bf16 %v85, %v85
    %v93 = vpack.c.bf16 %v86, %v86
    %v94 = vpack.c.bf16 %v87, %v87
    %v95 = vld [vmem:[#allocation5] sm:$0xff]
    %v96 = vld [vmem:[#allocation5 + $0x8] sm:$0xff]
    %v97 = vld [vmem:[#allocation5 + $0x10] sm:$0xff]
    %v98 = vld [vmem:[#allocation5 + $0x18] sm:$0xff]
    %v99 = vld [vmem:[#allocation5 + $0x20] sm:$0xff]
    %v100 = vld [vmem:[#allocation5 + $0x28] sm:$0xff]
    %v101 = vld [vmem:[#allocation5 + $0x30] sm:$0xff]
    %v102 = vld [vmem:[#allocation5 + $0x38] sm:$0xff]
    %v103 = vld [vmem:[#allocation5 + $0x40] sm:$0xff]
    %v104 = vld [vmem:[#allocation5 + $0x48] sm:$0xff]
    %v105 = vld [vmem:[#allocation5 + $0x50] sm:$0xff]
    %v106 = vld [vmem:[#allocation5 + $0x58] sm:$0xff]
    %v107 = vld [vmem:[#allocation5 + $0x60] sm:$0xff]
    %v108 = vld [vmem:[#allocation5 + $0x68] sm:$0xff]
    %v109 = vld [vmem:[#allocation5 + $0x70] sm:$0xff]
    %v110 = vld [vmem:[#allocation5 + $0x78] sm:$0xff]
    %v111 = vld [vmem:[#allocation5 + $0x80] sm:$0xff]
    %v112 = vld [vmem:[#allocation5 + $0x88] sm:$0xff]
    %v113 = vld [vmem:[#allocation5 + $0x90] sm:$0xff]
    %v114 = vld [vmem:[#allocation5 + $0x98] sm:$0xff]
    %v115 = vld [vmem:[#allocation5 + $0xa0] sm:$0xff]
    %v116 = vld [vmem:[#allocation5 + $0xa8] sm:$0xff]
    %v117 = vld [vmem:[#allocation5 + $0xb0] sm:$0xff]
    %v118 = vld [vmem:[#allocation5 + $0xb8] sm:$0xff]
    %v119 = vld [vmem:[#allocation5 + $0xc0] sm:$0xff]
    %v120 = vld [vmem:[#allocation5 + $0xc8] sm:$0xff]
    %v121 = vld [vmem:[#allocation5 + $0xd0] sm:$0xff]
    %v122 = vld [vmem:[#allocation5 + $0xd8] sm:$0xff]
    %v123 = vld [vmem:[#allocation5 + $0xe0] sm:$0xff]
    %v124 = vld [vmem:[#allocation5 + $0xe8] sm:$0xff]
    %v125 = vld [vmem:[#allocation5 + $0xf0] sm:$0xff]
    %v126 = vld [vmem:[#allocation5 + $0xf8] sm:$0xff]
    %v127 = vld [vmem:[#allocation5 + $0x100] sm:$0xff]
    %v128 = vld [vmem:[#allocation5 + $0x108] sm:$0xff]
    %v129 = vld [vmem:[#allocation5 + $0x110] sm:$0xff]
    %v130 = vld [vmem:[#allocation5 + $0x118] sm:$0xff]
    %v131 = vld [vmem:[#allocation5 + $0x120] sm:$0xff]
    %v132 = vld [vmem:[#allocation5 + $0x128] sm:$0xff]
    %v133 = vld [vmem:[#allocation5 + $0x130] sm:$0xff]
    %v134 = vld [vmem:[#allocation5 + $0x138] sm:$0xff]
    %v135 = vld [vmem:[#allocation5 + $0x140] sm:$0xff]
    %v136 = vld [vmem:[#allocation5 + $0x148] sm:$0xff]
    %v137 = vld [vmem:[#allocation5 + $0x150] sm:$0xff]
    %v138 = vld [vmem:[#allocation5 + $0x158] sm:$0xff]
    %v139 = vld [vmem:[#allocation5 + $0x160] sm:$0xff]
    %v140 = vld [vmem:[#allocation5 + $0x168] sm:$0xff]
    %v141 = vld [vmem:[#allocation5 + $0x170] sm:$0xff]
    %v142 = vld [vmem:[#allocation5 + $0x178] sm:$0xff]
    %v143 = vld [vmem:[#allocation5 + $0x180] sm:$0xff]
    %v144 = vld [vmem:[#allocation5 + $0x188] sm:$0xff]
    %v145 = vld [vmem:[#allocation5 + $0x190] sm:$0xff]
    %v146 = vld [vmem:[#allocation5 + $0x198] sm:$0xff]
    %v147 = vld [vmem:[#allocation5 + $0x1a0] sm:$0xff]
    %v148 = vld [vmem:[#allocation5 + $0x1a8] sm:$0xff]
    %v149 = vld [vmem:[#allocation5 + $0x1b0] sm:$0xff]
    %v150 = vld [vmem:[#allocation5 + $0x1b8] sm:$0xff]
    %v151 = vld [vmem:[#allocation5 + $0x1c0] sm:$0xff]
    %v152 = vld [vmem:[#allocation5 + $0x1c8] sm:$0xff]
    %v153 = vld [vmem:[#allocation5 + $0x1d0] sm:$0xff]
    %v154 = vld [vmem:[#allocation5 + $0x1d8] sm:$0xff]
    %v155 = vld [vmem:[#allocation5 + $0x1e0] sm:$0xff]
    %v156 = vld [vmem:[#allocation5 + $0x1e8] sm:$0xff]
    %v157 = vld [vmem:[#allocation5 + $0x1f0] sm:$0xff]
    %v158 = vld [vmem:[#allocation5 + $0x1f8] sm:$0xff]
    %v159 = vld [vmem:[#allocation5 + $0x200] sm:$0xff]
    %v160 = vld [vmem:[#allocation5 + $0x208] sm:$0xff]
    %v161 = vld [vmem:[#allocation5 + $0x210] sm:$0xff]
    %v162 = vld [vmem:[#allocation5 + $0x218] sm:$0xff]
    %v163 = vld [vmem:[#allocation5 + $0x220] sm:$0xff]
    %v164 = vld [vmem:[#allocation5 + $0x228] sm:$0xff]
    %v165 = vld [vmem:[#allocation5 + $0x230] sm:$0xff]
    %v166 = vld [vmem:[#allocation5 + $0x238] sm:$0xff]
    %v167 = vld [vmem:[#allocation5 + $0x240] sm:$0xff]
    %v168 = vld [vmem:[#allocation5 + $0x248] sm:$0xff]
    %v169 = vld [vmem:[#allocation5 + $0x250] sm:$0xff]
    %v170 = vld [vmem:[#allocation5 + $0x258] sm:$0xff]
    %v171 = vld [vmem:[#allocation5 + $0x260] sm:$0xff]
    %v172 = vld [vmem:[#allocation5 + $0x268] sm:$0xff]
    %v173 = vld [vmem:[#allocation5 + $0x270] sm:$0xff]
    %v174 = vld [vmem:[#allocation5 + $0x278] sm:$0xff]
    %v175 = vld [vmem:[#allocation5 + $0x280] sm:$0xff]
    %v176 = vld [vmem:[#allocation5 + $0x288] sm:$0xff]
    %v177 = vld [vmem:[#allocation5 + $0x290] sm:$0xff]
    %v178 = vld [vmem:[#allocation5 + $0x298] sm:$0xff]
    %v179 = vld [vmem:[#allocation5 + $0x2a0] sm:$0xff]
    %v180 = vld [vmem:[#allocation5 + $0x2a8] sm:$0xff]
    %v181 = vld [vmem:[#allocation5 + $0x2b0] sm:$0xff]
    %v182 = vld [vmem:[#allocation5 + $0x2b8] sm:$0xff]
    %v183 = vld [vmem:[#allocation5 + $0x2c0] sm:$0xff]
    %v184 = vld [vmem:[#allocation5 + $0x2c8] sm:$0xff]
    %v185 = vld [vmem:[#allocation5 + $0x2d0] sm:$0xff]
    %v186 = vld [vmem:[#allocation5 + $0x2d8] sm:$0xff]
    %v187 = vld [vmem:[#allocation5 + $0x2e0] sm:$0xff]
    %v188 = vld [vmem:[#allocation5 + $0x2e8] sm:$0xff]
    %v189 = vld [vmem:[#allocation5 + $0x2f0] sm:$0xff]
    %v190 = vld [vmem:[#allocation5 + $0x2f8] sm:$0xff]
    %v191 = vld [vmem:[#allocation5 + $0x300] sm:$0xff]
    %v192 = vld [vmem:[#allocation5 + $0x308] sm:$0xff]
    %v193 = vld [vmem:[#allocation7] sm:$0x3]
    %v195 = vperm.slane %v193, 0
    %v196 = vperm.slane %v193, 1
    %v297 = vunpack.c.l.b16 %v95
    %v298 = vunpack.c.h.b16 %v95
    %v299 = vunpack.c.l.b16 %v96
    %v300 = vunpack.c.h.b16 %v96
    %v301 = vunpack.c.l.b16 %v97
    %v302 = vunpack.c.h.b16 %v97
    %v303 = vunpack.c.l.b16 %v98
    %v304 = vunpack.c.h.b16 %v98
    %v305 = vunpack.c.l.b16 %v99
    %v306 = vunpack.c.h.b16 %v99
    %v307 = vunpack.c.l.b16 %v100
    %v308 = vunpack.c.h.b16 %v100
    %v309 = vunpack.c.l.b16 %v101
    %v310 = vunpack.c.h.b16 %v101
    %v311 = vunpack.c.l.b16 %v102
    %v312 = vunpack.c.h.b16 %v102
    %v313 = vunpack.c.l.b16 %v103
    %v314 = vunpack.c.h.b16 %v103
    %v315 = vunpack.c.l.b16 %v104
    %v316 = vunpack.c.h.b16 %v104
    %v317 = vunpack.c.l.b16 %v105
    %v318 = vunpack.c.h.b16 %v105
    %v319 = vunpack.c.l.b16 %v106
    %v320 = vunpack.c.h.b16 %v106
    %v321 = vunpack.c.l.b16 %v107
    %v322 = vunpack.c.h.b16 %v107
    %v323 = vunpack.c.l.b16 %v108
    %v324 = vunpack.c.h.b16 %v108
    %v325 = vunpack.c.l.b16 %v109
    %v326 = vunpack.c.h.b16 %v109
    %v327 = vunpack.c.l.b16 %v110
    %v328 = vunpack.c.h.b16 %v110
    %v329 = vunpack.c.l.b16 %v111
    %v330 = vunpack.c.h.b16 %v111
    %v331 = vunpack.c.l.b16 %v112
    %v332 = vunpack.c.h.b16 %v112
    %v333 = vunpack.c.l.b16 %v113
    %v334 = vunpack.c.h.b16 %v113
    %v335 = vunpack.c.l.b16 %v114
    %v336 = vunpack.c.h.b16 %v114
    %v337 = vunpack.c.l.b16 %v115
    %v338 = vunpack.c.h.b16 %v115
    %v339 = vunpack.c.l.b16 %v116
    %v340 = vunpack.c.h.b16 %v116
    %v341 = vunpack.c.l.b16 %v117
    %v342 = vunpack.c.h.b16 %v117
    %v343 = vunpack.c.l.b16 %v118
    %v344 = vunpack.c.h.b16 %v118
    %v345 = vunpack.c.l.b16 %v119
    %v346 = vunpack.c.h.b16 %v119
    %v347 = vunpack.c.l.b16 %v120
    %v348 = vunpack.c.h.b16 %v120
    %v349 = vunpack.c.l.b16 %v121
    %v350 = vunpack.c.h.b16 %v121
    %v351 = vunpack.c.l.b16 %v122
    %v352 = vunpack.c.h.b16 %v122
    %v353 = vunpack.c.l.b16 %v123
    %v354 = vunpack.c.h.b16 %v123
    %v355 = vunpack.c.l.b16 %v124
    %v356 = vunpack.c.h.b16 %v124
    %v357 = vunpack.c.l.b16 %v125
    %v358 = vunpack.c.h.b16 %v125
    %v359 = vunpack.c.l.b16 %v126
    %v360 = vunpack.c.h.b16 %v126
    %v361 = vunpack.c.l.b16 %v127
    %v362 = vunpack.c.h.b16 %v127
    %v363 = vunpack.c.l.b16 %v128
    %v364 = vunpack.c.h.b16 %v128
    %v365 = vunpack.c.l.b16 %v129
    %v366 = vunpack.c.h.b16 %v129
    %v367 = vunpack.c.l.b16 %v130
    %v368 = vunpack.c.h.b16 %v130
    %v369 = vunpack.c.l.b16 %v131
    %v370 = vunpack.c.h.b16 %v131
    %v371 = vunpack.c.l.b16 %v132
    %v372 = vunpack.c.h.b16 %v132
    %v373 = vunpack.c.l.b16 %v133
    %v374 = vunpack.c.h.b16 %v133
    %v375 = vunpack.c.l.b16 %v134
    %v376 = vunpack.c.h.b16 %v134
    %v377 = vunpack.c.l.b16 %v135
    %v378 = vunpack.c.h.b16 %v135
    %v379 = vunpack.c.l.b16 %v136
    %v380 = vunpack.c.h.b16 %v136
    %v381 = vunpack.c.l.b16 %v137
    %v382 = vunpack.c.h.b16 %v137
    %v383 = vunpack.c.l.b16 %v138
    %v384 = vunpack.c.h.b16 %v138
    %v385 = vunpack.c.l.b16 %v139
    %v386 = vunpack.c.h.b16 %v139
    %v387 = vunpack.c.l.b16 %v140
    %v388 = vunpack.c.h.b16 %v140
    %v389 = vunpack.c.l.b16 %v141
    %v390 = vunpack.c.h.b16 %v141
    %v391 = vunpack.c.l.b16 %v142
    %v392 = vunpack.c.h.b16 %v142
    %v393 = vunpack.c.l.b16 %v143
    %v394 = vunpack.c.h.b16 %v143
    %v395 = vunpack.c.l.b16 %v144
    %v396 = vunpack.c.h.b16 %v144
    %v397 = vunpack.c.l.b16 %v145
    %v398 = vunpack.c.h.b16 %v145
    %v399 = vunpack.c.l.b16 %v146
    %v400 = vunpack.c.h.b16 %v146
    %v401 = vunpack.c.l.b16 %v147
    %v402 = vunpack.c.h.b16 %v147
    %v403 = vunpack.c.l.b16 %v148
    %v404 = vunpack.c.h.b16 %v148
    %v405 = vunpack.c.l.b16 %v149
    %v406 = vunpack.c.h.b16 %v149
    %v407 = vunpack.c.l.b16 %v150
    %v408 = vunpack.c.h.b16 %v150
    %v409 = vunpack.c.l.b16 %v151
    %v410 = vunpack.c.h.b16 %v151
    %v411 = vunpack.c.l.b16 %v152
    %v412 = vunpack.c.h.b16 %v152
    %v413 = vunpack.c.l.b16 %v153
    %v414 = vunpack.c.h.b16 %v153
    %v415 = vunpack.c.l.b16 %v154
    %v416 = vunpack.c.h.b16 %v154
    %v417 = vunpack.c.l.b16 %v155
    %v418 = vunpack.c.h.b16 %v155
    %v419 = vunpack.c.l.b16 %v156
    %v420 = vunpack.c.h.b16 %v156
    %v421 = vunpack.c.l.b16 %v157
    %v422 = vunpack.c.h.b16 %v157
    %v423 = vunpack.c.l.b16 %v158
    %v424 = vunpack.c.h.b16 %v158
    %v425 = vunpack.c.l.b16 %v159
    %v426 = vunpack.c.h.b16 %v159
    %v427 = vunpack.c.l.b16 %v160
    %v428 = vunpack.c.h.b16 %v160
    %v429 = vunpack.c.l.b16 %v161
    %v430 = vunpack.c.h.b16 %v161
    %v431 = vunpack.c.l.b16 %v162
    %v432 = vunpack.c.h.b16 %v162
    %v433 = vunpack.c.l.b16 %v163
    %v434 = vunpack.c.h.b16 %v163
    %v435 = vunpack.c.l.b16 %v164
    %v436 = vunpack.c.h.b16 %v164
    %v437 = vunpack.c.l.b16 %v165
    %v438 = vunpack.c.h.b16 %v165
    %v439 = vunpack.c.l.b16 %v166
    %v440 = vunpack.c.h.b16 %v166
    %v441 = vunpack.c.l.b16 %v167
    %v442 = vunpack.c.h.b16 %v167
    %v443 = vunpack.c.l.b16 %v168
    %v444 = vunpack.c.h.b16 %v168
    %v445 = vunpack.c.l.b16 %v169
    %v446 = vunpack.c.h.b16 %v169
    %v447 = vunpack.c.l.b16 %v170
    %v448 = vunpack.c.h.b16 %v170
    %v449 = vunpack.c.l.b16 %v171
    %v450 = vunpack.c.h.b16 %v171
    %v451 = vunpack.c.l.b16 %v172
    %v452 = vunpack.c.h.b16 %v172
    %v453 = vunpack.c.l.b16 %v173
    %v454 = vunpack.c.h.b16 %v173
    %v455 = vunpack.c.l.b16 %v174
    %v456 = vunpack.c.h.b16 %v174
    %v457 = vunpack.c.l.b16 %v175
    %v458 = vunpack.c.h.b16 %v175
    %v459 = vunpack.c.l.b16 %v176
    %v460 = vunpack.c.h.b16 %v176
    %v461 = vunpack.c.l.b16 %v177
    %v462 = vunpack.c.h.b16 %v177
    %v463 = vunpack.c.l.b16 %v178
    %v464 = vunpack.c.h.b16 %v178
    %v465 = vunpack.c.l.b16 %v179
    %v466 = vunpack.c.h.b16 %v179
    %v467 = vunpack.c.l.b16 %v180
    %v468 = vunpack.c.h.b16 %v180
    %v469 = vunpack.c.l.b16 %v181
    %v470 = vunpack.c.h.b16 %v181
    %v471 = vunpack.c.l.b16 %v182
    %v472 = vunpack.c.h.b16 %v182
    %v473 = vunpack.c.l.b16 %v183
    %v474 = vunpack.c.h.b16 %v183
    %v475 = vunpack.c.l.b16 %v184
    %v476 = vunpack.c.h.b16 %v184
    %v477 = vunpack.c.l.b16 %v185
    %v478 = vunpack.c.h.b16 %v185
    %v479 = vunpack.c.l.b16 %v186
    %v480 = vunpack.c.h.b16 %v186
    %v481 = vunpack.c.l.b16 %v187
    %v482 = vunpack.c.h.b16 %v187
    %v483 = vunpack.c.l.b16 %v188
    %v484 = vunpack.c.h.b16 %v188
    %v485 = vunpack.c.l.b16 %v189
    %v486 = vunpack.c.h.b16 %v189
    %v487 = vunpack.c.l.b16 %v190
    %v488 = vunpack.c.h.b16 %v190
    %v489 = vunpack.c.l.b16 %v191
    %v490 = vunpack.c.h.b16 %v191
    %v491 = vunpack.c.l.b16 %v192
    %v492 = vunpack.c.h.b16 %v192
    %v493 = vpack.c.b16 %v299, %v297
    %v494 = vpack.c.b16 %v300, %v298
    %v495 = vpack.c.b16 %v303, %v301
    %v496 = vpack.c.b16 %v304, %v302
    %v497 = vpack.c.b16 %v307, %v305
    %v498 = vpack.c.b16 %v308, %v306
    %v499 = vpack.c.b16 %v311, %v309
    %v500 = vpack.c.b16 %v312, %v310
    %v501 = vpack.c.b16 %v315, %v313
    %v502 = vpack.c.b16 %v316, %v314
    %v503 = vpack.c.b16 %v319, %v317
    %v504 = vpack.c.b16 %v320, %v318
    %v505 = vpack.c.b16 %v323, %v321
    %v506 = vpack.c.b16 %v324, %v322
    %v507 = vpack.c.b16 %v327, %v325
    %v508 = vpack.c.b16 %v328, %v326
    %v509 = vpack.c.b16 %v331, %v329
    %v510 = vpack.c.b16 %v332, %v330
    %v511 = vpack.c.b16 %v335, %v333
    %v512 = vpack.c.b16 %v336, %v334
    %v513 = vpack.c.b16 %v339, %v337
    %v514 = vpack.c.b16 %v340, %v338
    %v515 = vpack.c.b16 %v343, %v341
    %v516 = vpack.c.b16 %v344, %v342
    %v517 = vpack.c.b16 %v347, %v345
    %v518 = vpack.c.b16 %v348, %v346
    %v519 = vpack.c.b16 %v351, %v349
    %v520 = vpack.c.b16 %v352, %v350
    %v521 = vpack.c.b16 %v355, %v353
    %v522 = vpack.c.b16 %v356, %v354
    %v523 = vpack.c.b16 %v359, %v357
    %v524 = vpack.c.b16 %v360, %v358
    %v525 = vpack.c.b16 %v363, %v361
    %v526 = vpack.c.b16 %v364, %v362
    %v527 = vpack.c.b16 %v367, %v365
    %v528 = vpack.c.b16 %v368, %v366
    %v529 = vpack.c.b16 %v371, %v369
    %v530 = vpack.c.b16 %v372, %v370
    %v531 = vpack.c.b16 %v375, %v373
    %v532 = vpack.c.b16 %v376, %v374
    %v533 = vpack.c.b16 %v379, %v377
    %v534 = vpack.c.b16 %v380, %v378
    %v535 = vpack.c.b16 %v383, %v381
    %v536 = vpack.c.b16 %v384, %v382
    %v537 = vpack.c.b16 %v387, %v385
    %v538 = vpack.c.b16 %v388, %v386
    %v539 = vpack.c.b16 %v391, %v389
    %v540 = vpack.c.b16 %v392, %v390
    %v541 = vpack.c.b16 %v395, %v393
    %v542 = vpack.c.b16 %v396, %v394
    %v543 = vpack.c.b16 %v399, %v397
    %v544 = vpack.c.b16 %v400, %v398
    %v545 = vpack.c.b16 %v403, %v401
    %v546 = vpack.c.b16 %v404, %v402
    %v547 = vpack.c.b16 %v407, %v405
    %v548 = vpack.c.b16 %v408, %v406
    %v549 = vpack.c.b16 %v411, %v409
    %v550 = vpack.c.b16 %v412, %v410
    %v551 = vpack.c.b16 %v415, %v413
    %v552 = vpack.c.b16 %v416, %v414
    %v553 = vpack.c.b16 %v419, %v417
    %v554 = vpack.c.b16 %v420, %v418
    %v555 = vpack.c.b16 %v423, %v421
    %v556 = vpack.c.b16 %v424, %v422
    %v557 = vpack.c.b16 %v427, %v425
    %v558 = vpack.c.b16 %v428, %v426
    %v559 = vpack.c.b16 %v431, %v429
    %v560 = vpack.c.b16 %v432, %v430
    %v561 = vpack.c.b16 %v435, %v433
    %v562 = vpack.c.b16 %v436, %v434
    %v563 = vpack.c.b16 %v439, %v437
    %v564 = vpack.c.b16 %v440, %v438
    %v565 = vpack.c.b16 %v443, %v441
    %v566 = vpack.c.b16 %v444, %v442
    %v567 = vpack.c.b16 %v447, %v445
    %v568 = vpack.c.b16 %v448, %v446
    %v569 = vpack.c.b16 %v451, %v449
    %v570 = vpack.c.b16 %v452, %v450
    %v571 = vpack.c.b16 %v455, %v453
    %v572 = vpack.c.b16 %v456, %v454
    %v573 = vpack.c.b16 %v459, %v457
    %v574 = vpack.c.b16 %v460, %v458
    %v575 = vpack.c.b16 %v463, %v461
    %v576 = vpack.c.b16 %v464, %v462
    %v577 = vpack.c.b16 %v467, %v465
    %v578 = vpack.c.b16 %v468, %v466
    %v579 = vpack.c.b16 %v471, %v469
    %v580 = vpack.c.b16 %v472, %v470
    %v581 = vpack.c.b16 %v475, %v473
    %v582 = vpack.c.b16 %v476, %v474
    %v583 = vpack.c.b16 %v479, %v477
    %v584 = vpack.c.b16 %v480, %v478
    %v585 = vpack.c.b16 %v483, %v481
    %v586 = vpack.c.b16 %v484, %v482
    %v587 = vpack.c.b16 %v487, %v485
    %v588 = vpack.c.b16 %v488, %v486
    %v589 = vpack.c.b16 %v491, %v489
    %v590 = vpack.c.b16 %v492, %v490
    %vm689 = vcmask 130048
    %v691 = vsel %vm689, %v94, 0
    %693 = vmatpush.bf16.msra.mxu0 %v507
    %694 = vmatpush.bf16.msra.mxu0 %v505
    %695 = vmatpush.bf16.msra.mxu0 %v503
    %696 = vmatpush.bf16.msra.mxu0 %v501
    %697 = vmatpush.bf16.msra.mxu0 %v499
    %698 = vmatpush.bf16.msra.mxu0 %v497
    %699 = vmatpush.bf16.msra.mxu0 %v495
    %700 = vmatpush.bf16.msra.mxu0 %v493
    %701 = vmatmul.bf16.gmra.mxu0 %v88
    %v702 = vpop.f32.mrf.mxu0
    %v703 = vadd.f32 %v195, %v702
    %v704 = vpop.f32.mrf.mxu0
    %705 = vdwg.mxu0
    %706 = vmatpush.bf16.msra.mxu0 %v523
    %707 = vmatpush.bf16.msra.mxu0 %v521
    %708 = vmatpush.bf16.msra.mxu0 %v519
    %709 = vmatpush.bf16.msra.mxu0 %v517
    %710 = vmatpush.bf16.msra.mxu0 %v515
    %711 = vmatpush.bf16.msra.mxu0 %v513
    %712 = vmatpush.bf16.msra.mxu0 %v511
    %713 = vmatpush.bf16.msra.mxu0 %v509
    %714 = vmatmul.bf16.gmra.mxu0 %v89
    %v715 = vpop.f32.mrf.mxu0
    %v716 = vadd.f32 %v703, %v715
    %v717 = vpop.f32.mrf.mxu0
    %718 = vdwg.mxu0
    %719 = vmatpush.bf16.msra.mxu0 %v539
    %720 = vmatpush.bf16.msra.mxu0 %v537
    %721 = vmatpush.bf16.msra.mxu0 %v535
    %722 = vmatpush.bf16.msra.mxu0 %v533
    %723 = vmatpush.bf16.msra.mxu0 %v531
    %724 = vmatpush.bf16.msra.mxu0 %v529
    %725 = vmatpush.bf16.msra.mxu0 %v527
    %726 = vmatpush.bf16.msra.mxu0 %v525
    %727 = vmatmul.bf16.gmra.mxu0 %v90
    %v728 = vpop.f32.mrf.mxu0
    %v729 = vadd.f32 %v716, %v728
    %v730 = vpop.f32.mrf.mxu0
    %731 = vdwg.mxu0
    %732 = vmatpush.bf16.msra.mxu0 %v555
    %733 = vmatpush.bf16.msra.mxu0 %v553
    %734 = vmatpush.bf16.msra.mxu0 %v551
    %735 = vmatpush.bf16.msra.mxu0 %v549
    %736 = vmatpush.bf16.msra.mxu0 %v547
    %737 = vmatpush.bf16.msra.mxu0 %v545
    %738 = vmatpush.bf16.msra.mxu0 %v543
    %739 = vmatpush.bf16.msra.mxu0 %v541
    %740 = vmatmul.bf16.gmra.mxu0 %v91
    %v741 = vpop.f32.mrf.mxu0
    %v742 = vadd.f32 %v729, %v741
    %v743 = vpop.f32.mrf.mxu0
    %744 = vdwg.mxu0
    %745 = vmatpush.bf16.msra.mxu0 %v571
    %746 = vmatpush.bf16.msra.mxu0 %v569
    %747 = vmatpush.bf16.msra.mxu0 %v567
    %748 = vmatpush.bf16.msra.mxu0 %v565
    %749 = vmatpush.bf16.msra.mxu0 %v563
    %750 = vmatpush.bf16.msra.mxu0 %v561
    %751 = vmatpush.bf16.msra.mxu0 %v559
    %752 = vmatpush.bf16.msra.mxu0 %v557
    %753 = vmatmul.bf16.gmra.mxu0 %v92
    %v754 = vpop.f32.mrf.mxu0
    %v755 = vadd.f32 %v742, %v754
    %v756 = vpop.f32.mrf.mxu0
    %757 = vdwg.mxu0
    %758 = vmatpush.bf16.msra.mxu0 %v587
    %759 = vmatpush.bf16.msra.mxu0 %v585
    %760 = vmatpush.bf16.msra.mxu0 %v583
    %761 = vmatpush.bf16.msra.mxu0 %v581
    %762 = vmatpush.bf16.msra.mxu0 %v579
    %763 = vmatpush.bf16.msra.mxu0 %v577
    %764 = vmatpush.bf16.msra.mxu0 %v575
    %765 = vmatpush.bf16.msra.mxu0 %v573
    %766 = vmatmul.bf16.gmra.mxu0 %v93
    %v767 = vpop.f32.mrf.mxu0
    %v768 = vadd.f32 %v755, %v767
    %v769 = vpop.f32.mrf.mxu0
    %770 = vdwg.mxu0
    %771 = vmatpush.bf16.msra.mxu0 0
    %772 = vmatpush.bf16.msra.mxu0 0
    %773 = vmatpush.bf16.msra.mxu0 0
    %774 = vmatpush.bf16.msra.mxu0 0
    %775 = vmatpush.bf16.msra.mxu0 0
    %776 = vmatpush.bf16.msra.mxu0 0
    %777 = vmatpush.bf16.msra.mxu0 0
    %778 = vmatpush.bf16.msra.mxu0 %v589
    %779 = vmatmul.bf16.gmra.mxu0 %v691
    %v780 = vpop.f32.mrf.mxu0
    %v781 = vadd.f32 %v768, %v780
    %v782 = vpop.f32.mrf.mxu0
    %783 = vdwg.mxu0
    %784 = vmatpush.bf16.msra.mxu0 %v508
    %785 = vmatpush.bf16.msra.mxu0 %v506
    %786 = vmatpush.bf16.msra.mxu0 %v504
    %787 = vmatpush.bf16.msra.mxu0 %v502
    %788 = vmatpush.bf16.msra.mxu0 %v500
    %789 = vmatpush.bf16.msra.mxu0 %v498
    %790 = vmatpush.bf16.msra.mxu0 %v496
    %791 = vmatpush.bf16.msra.mxu0 %v494
    %792 = vmatmul.bf16.gmra.mxu0 %v88
    %v793 = vpop.f32.mrf.mxu0
    %v794 = vadd.f32 %v196, %v793
    %v795 = vpop.f32.mrf.mxu0
    %796 = vdwg.mxu0
    %797 = vmatpush.bf16.msra.mxu0 %v524
    %798 = vmatpush.bf16.msra.mxu0 %v522
    %799 = vmatpush.bf16.msra.mxu0 %v520
    %800 = vmatpush.bf16.msra.mxu0 %v518
    %801 = vmatpush.bf16.msra.mxu0 %v516
    %802 = vmatpush.bf16.msra.mxu0 %v514
    %803 = vmatpush.bf16.msra.mxu0 %v512
    %804 = vmatpush.bf16.msra.mxu0 %v510
    %805 = vmatmul.bf16.gmra.mxu0 %v89
    %v806 = vpop.f32.mrf.mxu0
    %v807 = vadd.f32 %v794, %v806
    %v808 = vpop.f32.mrf.mxu0
    %809 = vdwg.mxu0
    %810 = vmatpush.bf16.msra.mxu0 %v540
    %811 = vmatpush.bf16.msra.mxu0 %v538
    %812 = vmatpush.bf16.msra.mxu0 %v536
    %813 = vmatpush.bf16.msra.mxu0 %v534
    %814 = vmatpush.bf16.msra.mxu0 %v532
    %815 = vmatpush.bf16.msra.mxu0 %v530
    %816 = vmatpush.bf16.msra.mxu0 %v528
    %817 = vmatpush.bf16.msra.mxu0 %v526
    %818 = vmatmul.bf16.gmra.mxu0 %v90
    %v819 = vpop.f32.mrf.mxu0
    %v820 = vadd.f32 %v807, %v819
    %v821 = vpop.f32.mrf.mxu0
    %822 = vdwg.mxu0
    %823 = vmatpush.bf16.msra.mxu0 %v556
    %824 = vmatpush.bf16.msra.mxu0 %v554
    %825 = vmatpush.bf16.msra.mxu0 %v552
    %826 = vmatpush.bf16.msra.mxu0 %v550
    %827 = vmatpush.bf16.msra.mxu0 %v548
    %828 = vmatpush.bf16.msra.mxu0 %v546
    %829 = vmatpush.bf16.msra.mxu0 %v544
    %830 = vmatpush.bf16.msra.mxu0 %v542
    %831 = vmatmul.bf16.gmra.mxu0 %v91
    %v832 = vpop.f32.mrf.mxu0
    %v833 = vadd.f32 %v820, %v832
    %v834 = vpop.f32.mrf.mxu0
    %835 = vdwg.mxu0
    %836 = vmatpush.bf16.msra.mxu0 %v572
    %837 = vmatpush.bf16.msra.mxu0 %v570
    %838 = vmatpush.bf16.msra.mxu0 %v568
    %839 = vmatpush.bf16.msra.mxu0 %v566
    %840 = vmatpush.bf16.msra.mxu0 %v564
    %841 = vmatpush.bf16.msra.mxu0 %v562
    %842 = vmatpush.bf16.msra.mxu0 %v560
    %843 = vmatpush.bf16.msra.mxu0 %v558
    %844 = vmatmul.bf16.gmra.mxu0 %v92
    %v845 = vpop.f32.mrf.mxu0
    %v846 = vadd.f32 %v833, %v845
    %v847 = vpop.f32.mrf.mxu0
    %848 = vdwg.mxu0
    %849 = vmatpush.bf16.msra.mxu0 %v588
    %850 = vmatpush.bf16.msra.mxu0 %v586
    %851 = vmatpush.bf16.msra.mxu0 %v584
    %852 = vmatpush.bf16.msra.mxu0 %v582
    %853 = vmatpush.bf16.msra.mxu0 %v580
    %854 = vmatpush.bf16.msra.mxu0 %v578
    %855 = vmatpush.bf16.msra.mxu0 %v576
    %856 = vmatpush.bf16.msra.mxu0 %v574
    %857 = vmatmul.bf16.gmra.mxu0 %v93
    %v858 = vpop.f32.mrf.mxu0
    %v859 = vadd.f32 %v846, %v858
    %v860 = vpop.f32.mrf.mxu0
    %861 = vdwg.mxu0
    %862 = vmatpush.bf16.msra.mxu0 0
    %863 = vmatpush.bf16.msra.mxu0 0
    %864 = vmatpush.bf16.msra.mxu0 0
    %865 = vmatpush.bf16.msra.mxu0 0
    %866 = vmatpush.bf16.msra.mxu0 0
    %867 = vmatpush.bf16.msra.mxu0 0
    %868 = vmatpush.bf16.msra.mxu0 0
    %869 = vmatpush.bf16.msra.mxu0 %v590
    %870 = vmatmul.bf16.gmra.mxu0 %v691
    %v871 = vpop.f32.mrf.mxu0
    %v872 = vadd.f32 %v859, %v871
    %v873 = vpop.f32.mrf.mxu0
    %874 = vdwg.mxu0
    %v875 = vmax.f32 %v781, 0.0
    %v876 = vmax.f32 %v872, 0.0
    %v877 = vpack.c.bf16 %v875, %v875
    %v878 = vpack.c.bf16 %v876, %v876
    %v879 = vld [vmem:[#allocation8] sm:$0xf]
    %v880 = vld [vmem:[#allocation8 + $0x4] sm:$0xf]
    %v881 = vld [vmem:[#allocation8 + $0x8] sm:$0xf]
    %v882 = vld [vmem:[#allocation8 + $0xc] sm:$0xf]
    %v883 = vld [vmem:[#allocation8 + $0x10] sm:$0xf]
    %v884 = vld [vmem:[#allocation8 + $0x14] sm:$0xf]
    %v885 = vld [vmem:[#allocation8 + $0x18] sm:$0xf]
    %v886 = vld [vmem:[#allocation8 + $0x1c] sm:$0xf]
    %v887 = vld [vmem:[#allocation8 + $0x20] sm:$0xf]
    %v888 = vld [vmem:[#allocation8 + $0x24] sm:$0xf]
    %v889 = vld [vmem:[#allocation8 + $0x28] sm:$0xf]
    %v890 = vld [vmem:[#allocation8 + $0x2c] sm:$0xf]
    %v891 = vld [vmem:[#allocation8 + $0x30] sm:$0xf]
    %v892 = vld [vmem:[#allocation8 + $0x34] sm:$0xf]
    %v893 = vld [vmem:[#allocation8 + $0x38] sm:$0xf]
    %v894 = vld [vmem:[#allocation8 + $0x3c] sm:$0xf]
    %v895 = vld [vmem:[#allocation8 + $0x40] sm:$0xf]
    %v896 = vld [vmem:[#allocation8 + $0x44] sm:$0xf]
    %v897 = vld [vmem:[#allocation8 + $0x48] sm:$0xf]
    %v898 = vld [vmem:[#allocation8 + $0x4c] sm:$0xf]
    %v899 = vld [vmem:[#allocation8 + $0x50] sm:$0xf]
    %v900 = vld [vmem:[#allocation8 + $0x54] sm:$0xf]
    %v901 = vld [vmem:[#allocation8 + $0x58] sm:$0xf]
    %v902 = vld [vmem:[#allocation8 + $0x5c] sm:$0xf]
    %v903 = vld [vmem:[#allocation8 + $0x60] sm:$0xf]
    %v904 = vld [vmem:[#allocation8 + $0x64] sm:$0xf]
    %v905 = vld [vmem:[#allocation8 + $0x68] sm:$0xf]
    %v906 = vld [vmem:[#allocation8 + $0x6c] sm:$0xf]
    %v907 = vld [vmem:[#allocation8 + $0x70] sm:$0xf]
    %v908 = vld [vmem:[#allocation8 + $0x74] sm:$0xf]
    %v909 = vld [vmem:[#allocation8 + $0x78] sm:$0xf]
    %v910 = vld [vmem:[#allocation8 + $0x7c] sm:$0xf]
    %v911 = vld [vmem:[%s4] sm:$0x1]
    %v913 = vperm.slane %v911, 0
    %v947 = vunpack.c.l.b16 %v879
    %v948 = vunpack.c.l.b16 %v880
    %v949 = vunpack.c.l.b16 %v881
    %v950 = vunpack.c.l.b16 %v882
    %v951 = vunpack.c.l.b16 %v883
    %v952 = vunpack.c.l.b16 %v884
    %v953 = vunpack.c.l.b16 %v885
    %v954 = vunpack.c.l.b16 %v886
    %v955 = vunpack.c.l.b16 %v887
    %v956 = vunpack.c.l.b16 %v888
    %v957 = vunpack.c.l.b16 %v889
    %v958 = vunpack.c.l.b16 %v890
    %v959 = vunpack.c.l.b16 %v891
    %v960 = vunpack.c.l.b16 %v892
    %v961 = vunpack.c.l.b16 %v893
    %v962 = vunpack.c.l.b16 %v894
    %v963 = vunpack.c.l.b16 %v895
    %v964 = vunpack.c.l.b16 %v896
    %v965 = vunpack.c.l.b16 %v897
    %v966 = vunpack.c.l.b16 %v898
    %v967 = vunpack.c.l.b16 %v899
    %v968 = vunpack.c.l.b16 %v900
    %v969 = vunpack.c.l.b16 %v901
    %v970 = vunpack.c.l.b16 %v902
    %v971 = vunpack.c.l.b16 %v903
    %v972 = vunpack.c.l.b16 %v904
    %v973 = vunpack.c.l.b16 %v905
    %v974 = vunpack.c.l.b16 %v906
    %v975 = vunpack.c.l.b16 %v907
    %v976 = vunpack.c.l.b16 %v908
    %v977 = vunpack.c.l.b16 %v909
    %v978 = vunpack.c.l.b16 %v910
    %v979 = vpack.c.b16 %v948, %v947
    %v980 = vpack.c.b16 %v950, %v949
    %v981 = vpack.c.b16 %v952, %v951
    %v982 = vpack.c.b16 %v954, %v953
    %v983 = vpack.c.b16 %v956, %v955
    %v984 = vpack.c.b16 %v958, %v957
    %v985 = vpack.c.b16 %v960, %v959
    %v986 = vpack.c.b16 %v962, %v961
    %v987 = vpack.c.b16 %v964, %v963
    %v988 = vpack.c.b16 %v966, %v965
    %v989 = vpack.c.b16 %v968, %v967
    %v990 = vpack.c.b16 %v970, %v969
    %v991 = vpack.c.b16 %v972, %v971
    %v992 = vpack.c.b16 %v974, %v973
    %v993 = vpack.c.b16 %v976, %v975
    %v994 = vpack.c.b16 %v978, %v977
    %1011 = vmatpush.bf16.msra.mxu0 %v986
    %1012 = vmatpush.bf16.msra.mxu0 %v985
    %1013 = vmatpush.bf16.msra.mxu0 %v984
    %1014 = vmatpush.bf16.msra.mxu0 %v983
    %1015 = vmatpush.bf16.msra.mxu0 %v982
    %1016 = vmatpush.bf16.msra.mxu0 %v981
    %1017 = vmatpush.bf16.msra.mxu0 %v980
    %1018 = vmatpush.bf16.msra.mxu0 %v979
    %1019 = vmatmul.bf16.gmra.mxu0 %v877
    %v1020 = vpop.f32.mrf.mxu0
    %v1021 = vadd.f32 %v913, %v1020
    %v1022 = vpop.f32.mrf.mxu0
    %1023 = vdwg.mxu0
    %1024 = vmatpush.bf16.msra.mxu0 %v994
    %1025 = vmatpush.bf16.msra.mxu0 %v993
    %1026 = vmatpush.bf16.msra.mxu0 %v992
    %1027 = vmatpush.bf16.msra.mxu0 %v991
    %1028 = vmatpush.bf16.msra.mxu0 %v990
    %1029 = vmatpush.bf16.msra.mxu0 %v989
    %1030 = vmatpush.bf16.msra.mxu0 %v988
    %1031 = vmatpush.bf16.msra.mxu0 %v987
    %1032 = vmatmul.bf16.gmra.mxu0 %v878
    %v1033 = vpop.f32.mrf.mxu0
    %v1034 = vadd.f32 %v1021, %v1033
    %v1035 = vpop.f32.mrf.mxu0
    %1036 = vdwg.mxu0
    %v1037 = vpack.c.bf16 %v1034, %v1034
    %1038 = vst [vmem:[#allocation10] sm:$0xf] %v1037
    // Predicated region
    $region38: #{tpu_custom_call.1} parent=1 // pred_check
      _
    $region39: #{tpu_custom_call.1} parent=1 // pred_check_branch
      %1040 = sbr.rel (0) target = $region41
    $region40: #{tpu_custom_call.1} parent=1 // pred_region
      %1042 = vsyncadd [#allocation4], 0
      %s1044 = sshll.u32 [#allocation10], 4
      %s1045 = int_to_ptr.vmem [resolvable:$true] %s1044
      %s1046 = sshll.u32 %s5, 4
      %s1047 = int_to_ptr.hbm [resolvable:$true] %s1046
      %1049 = dma.vmem_to_hbm [thread:$0]  %s1045, 64, %s1047, [#allocation4]
    $region41: #{tpu_custom_call.1} parent=1 // pred_fallthru
      _
    // Predicated region
    $region42: #{tpu_custom_call.1} parent=1 // pred_check
      _
    $region43: #{tpu_custom_call.1} parent=1 // pred_check_branch
      %1051 = sbr.rel (0) target = $region45
    $region44: #{tpu_custom_call.1} parent=1 // pred_region
      %1053 = dma.done [#allocation4], 64
    $region45: #{tpu_custom_call.1} parent=1 // pred_fallthru
      _
    %1054 = vsyncpa [#allocation3], 1
    %1055 = vsyncpa [#allocation6], 1
    %1056 = vsyncpa [#allocation9], 1
    %1057 = vsyncpa [#allocation4], 1

</llo_original>
